<compile_context>
chip_gen: v7x
topology: tpu7x:2x2x1
jax: 0.10.0
libtpu: 0.0.40
codegen_flags: <defaults>
</compile_context>

<pallas_src>
import jax
import jax.numpy as jnp
from jax.experimental import pallas as pl
from jax.experimental.pallas import tpu as pltpu

_LANE = 128
_SUB = 8
_GROUP = _LANE * _SUB                     # elements per dense (8, 128) tile
_TARGET_BLOCK_BYTES = 2 * 1024 * 1024     # per-input bytes per grid step


def _dice_partial_kernel(x_ref, t_ref, inter_ref, s2_ref, t2_ref):
    """Accumulate sum(s*t), sum(s*s), sum(t*t) partials for one partition."""
    # Zero this partition's accumulators on its first reduction step.
    @pl.when(pl.program_id(1) == 0)
    def _():
        inter_ref[...] = jnp.zeros_like(inter_ref)
        s2_ref[...] = jnp.zeros_like(s2_ref)
        t2_ref[...] = jnp.zeros_like(t2_ref)

    x = x_ref[...].astype(jnp.float32)          # (B, g_tile, 8, 128)
    t = t_ref[...].astype(jnp.float32)
    # sigmoid(x) == 0.5 * (tanh(x/2) + 1): one EUP push per element.
    s = 0.5 * (jnp.tanh(0.5 * x) + 1.0)

    # Reduce only over the non-minor group axis (axis=1): pure VPU adds,
    # no cross-lane/sublane (XLU) work in the hot loop.
    inter_ref[...] += jnp.sum(s * t, axis=1)[None]
    s2_ref[...] += jnp.sum(s * s, axis=1)[None]
    t2_ref[...] += jnp.sum(t * t, axis=1)[None]


def soft_dice_loss_binary(x, target):
    """Pallas implementation of SoftDiceLoss_binary.forward(input, target)."""
    b = x.shape[0]
    xf = x.reshape(b, -1)
    tf = target.reshape(b, -1)
    n = xf.shape[1]

    # ---- tiling --------------------------------------------------------
    g_total = pl.cdiv(n, _GROUP)                    # number of (8,128) groups
    x_itemsize = jnp.dtype(xf.dtype).itemsize
    t_itemsize = jnp.dtype(tf.dtype).itemsize
    bytes_per_group = b * _GROUP * max(x_itemsize, t_itemsize)
    g_tile = int(max(1, min(g_total, _TARGET_BLOCK_BYTES // bytes_per_group)))

    num_tiles = pl.cdiv(g_total, g_tile)
    p_parts = 2 if num_tiles >= 2 else 1            # megacore split (v7x)
    num_tiles = pl.cdiv(num_tiles, p_parts) * p_parts
    s_steps = num_tiles // p_parts
    g_all = num_tiles * g_tile
    n_pad = g_all * _GROUP

    # ---- pad + sublane-dense layout -------------------------------------
    if n_pad != n:
        # sigmoid(-1e9) == 0 exactly with the tanh form; padded target is 0,
        # so padded elements contribute nothing to any of the three sums.
        xf = jnp.pad(xf, ((0, 0), (0, n_pad - n)), constant_values=-1e9)
        tf = jnp.pad(tf, ((0, 0), (0, n_pad - n)), constant_values=0)
    x4 = xf.reshape(b, g_all, _SUB, _LANE)
    t4 = tf.reshape(b, g_all, _SUB, _LANE)

    in_block = (b, g_tile, _SUB, _LANE)
    out_block = (1, b, _SUB, _LANE)
    part_shape = jax.ShapeDtypeStruct((p_parts, b, _SUB, _LANE), jnp.float32)

    in_map = lambda pi, si: (0, pi * s_steps + si, 0, 0)
    out_map = lambda pi, si: (pi, 0, 0, 0)

    # 2 inputs x 2 pipeline buffers + elementwise temporaries + headroom;
    # stays well under v7x's 64 MiB physical VMEM.
    block_bytes = b * g_tile * _GROUP * (x_itemsize + t_itemsize)
    vmem_limit = int(min(48 * 1024 * 1024, 4 * block_bytes + (8 << 20)))

    inter_p, s2_p, t2_p = pl.pallas_call(
        _dice_partial_kernel,
        out_shape=(part_shape, part_shape, part_shape),
        grid_spec=pltpu.PrefetchScalarGridSpec(
            num_scalar_prefetch=0,
            grid=(p_parts, s_steps),
            in_specs=[
                pl.BlockSpec(in_block, in_map),
                pl.BlockSpec(in_block, in_map),
            ],
            out_specs=[
                pl.BlockSpec(out_block, out_map),
                pl.BlockSpec(out_block, out_map),
                pl.BlockSpec(out_block, out_map),
            ],
        ),
        compiler_params=pltpu.CompilerParams(
            dimension_semantics=("parallel", "arbitrary"),
            vmem_limit_bytes=vmem_limit,
        ),
    )(x4, t4)

    # ---- tiny finalize on the partial sums (a handful of flops) ----------
    inter = jnp.sum(inter_p, axis=(0, 2, 3))        # (B,)
    s2 = jnp.sum(s2_p, axis=(0, 2, 3))
    t2 = jnp.sum(t2_p, axis=(0, 2, 3))
    smooth = jnp.float32(0.01)
    score = jnp.sum(2.0 * (inter + smooth) / (s2 + t2 + smooth)) / float(b)
    return jnp.float32(1.0) - jnp.clip(score, 0.0, 1.0 - 1e-07)


def _reference(x, target):
    """Pure-JAX reference mirroring the PyTorch forward exactly."""
    smooth = 0.01
    b = x.shape[0]
    inp = jax.nn.sigmoid(x.astype(jnp.float32)).reshape(b, -1)
    tgt = target.astype(jnp.float32).reshape(b, -1)
    inter = jnp.sum(inp * tgt, axis=1) + smooth
    union = jnp.sum(inp * inp, axis=1) + jnp.sum(tgt * tgt, axis=1) + smooth
    score = jnp.sum(2.0 * inter / union) / float(b)
    return 1.0 - jnp.clip(score, 0.0, 1.0 - 1e-07)


if __name__ == "__main__":
    key = jax.random.PRNGKey(0)
    kx, kt = jax.random.split(key)

    B, C, H, W = 2, 4, 16, 16
    x = jax.random.normal(kx, (B, C, H, W), dtype=jnp.float32)
    # Binary target mask in {0., 1.}, same shape as input.
    target = (jax.random.uniform(kt, (B, C, H, W)) > 0.5).astype(jnp.float32)

    loss = jax.jit(soft_dice_loss_binary)(x, target)
    loss = jax.block_until_ready(loss)

    ref = jax.block_until_ready(_reference(x, target))
    assert jnp.allclose(loss, ref, atol=1e-5, rtol=1e-5), (loss, ref)

    print("KERNEL_OK")
</pallas_src>

<mosaic_0001>
module attributes {stable_mosaic.version = 11 : i64} {
  func.func @_dice_partial_kernel(%arg0: i32, %arg1: i32, %arg2: memref<2x1x8x128xf32, #tpu.memory_space<vmem>>, %arg3: memref<2x1x8x128xf32, #tpu.memory_space<vmem>>, %arg4: memref<1x2x8x128xf32, #tpu.memory_space<vmem>>, %arg5: memref<1x2x8x128xf32, #tpu.memory_space<vmem>>, %arg6: memref<1x2x8x128xf32, #tpu.memory_space<vmem>>) attributes {dimension_semantics = [#tpu.dimension_semantics<parallel>, #tpu.dimension_semantics<arbitrary>], iteration_bounds = array<i64: 1, 1>, scalar_prefetch = 0 : i64, scratch_operands = 0 : i64, tpu.core_type = #tpu.core_type<tc>, window_params = [{transform_indices = @transform_0, window_bounds = array<i64: 2, 1, 8, 128>}, {transform_indices = @transform_1, window_bounds = array<i64: 2, 1, 8, 128>}, {transform_indices = @transform_2, window_bounds = array<i64: 1, 2, 8, 128>}, {transform_indices = @transform_3, window_bounds = array<i64: 1, 2, 8, 128>}, {transform_indices = @transform_4, window_bounds = array<i64: 1, 2, 8, 128>}]} {
    %c0_i32 = arith.constant 0 : i32
    %0 = arith.cmpi eq, %arg1, %c0_i32 : i32
    %1 = arith.extui %0 : i1 to i32
    %c0_i32_0 = arith.constant 0 : i32
    %2 = arith.cmpi ne, %1, %c0_i32_0 : i32
    scf.if %2 {
      %cst_37 = arith.constant 0.000000e+00 : f32
      %30 = vector.broadcast %cst_37 : f32 to vector<1x2x8x128xf32>
      %c0_38 = arith.constant 0 : index
      %c0_39 = arith.constant 0 : index
      %c0_40 = arith.constant 0 : index
      %c0_41 = arith.constant 0 : index
      %31 = vector.load %arg4[%c0_38, %c0_39, %c0_40, %c0_41] : memref<1x2x8x128xf32, #tpu.memory_space<vmem>>, vector<1x2x8x128xf32>
      tpu.vector_store %arg4[%c0_38, %c0_39, %c0_40, %c0_41], %30 {strides = array<i32>} : memref<1x2x8x128xf32, #tpu.memory_space<vmem>>, vector<1x2x8x128xf32>,
      %cst_42 = arith.constant 0.000000e+00 : f32
      %32 = vector.broadcast %cst_42 : f32 to vector<1x2x8x128xf32>
      %c0_43 = arith.constant 0 : index
      %c0_44 = arith.constant 0 : index
      %c0_45 = arith.constant 0 : index
      %c0_46 = arith.constant 0 : index
      %33 = vector.load %arg5[%c0_43, %c0_44, %c0_45, %c0_46] : memref<1x2x8x128xf32, #tpu.memory_space<vmem>>, vector<1x2x8x128xf32>
      tpu.vector_store %arg5[%c0_43, %c0_44, %c0_45, %c0_46], %32 {strides = array<i32>} : memref<1x2x8x128xf32, #tpu.memory_space<vmem>>, vector<1x2x8x128xf32>,
      %cst_47 = arith.constant 0.000000e+00 : f32
      %34 = vector.broadcast %cst_47 : f32 to vector<1x2x8x128xf32>
      %c0_48 = arith.constant 0 : index
      %c0_49 = arith.constant 0 : index
      %c0_50 = arith.constant 0 : index
      %c0_51 = arith.constant 0 : index
      %35 = vector.load %arg6[%c0_48, %c0_49, %c0_50, %c0_51] : memref<1x2x8x128xf32, #tpu.memory_space<vmem>>, vector<1x2x8x128xf32>
      tpu.vector_store %arg6[%c0_48, %c0_49, %c0_50, %c0_51], %34 {strides = array<i32>} : memref<1x2x8x128xf32, #tpu.memory_space<vmem>>, vector<1x2x8x128xf32>,
    } else {
    }
    %c0 = arith.constant 0 : index
    %c0_1 = arith.constant 0 : index
    %c0_2 = arith.constant 0 : index
    %c0_3 = arith.constant 0 : index
    %3 = vector.load %arg2[%c0, %c0_1, %c0_2, %c0_3] : memref<2x1x8x128xf32, #tpu.memory_space<vmem>>, vector<2x1x8x128xf32>
    %c0_4 = arith.constant 0 : index
    %c0_5 = arith.constant 0 : index
    %c0_6 = arith.constant 0 : index
    %c0_7 = arith.constant 0 : index
    %4 = vector.load %arg3[%c0_4, %c0_5, %c0_6, %c0_7] : memref<2x1x8x128xf32, #tpu.memory_space<vmem>>, vector<2x1x8x128xf32>
    %cst = arith.constant 5.000000e-01 : f32
    %5 = vector.broadcast %cst : f32 to vector<2x1x8x128xf32>
    %6 = arith.mulf %5, %3 : vector<2x1x8x128xf32>
    %7 = math.tanh %6 : vector<2x1x8x128xf32>
    %cst_8 = arith.constant 1.000000e+00 : f32
    %8 = vector.broadcast %cst_8 : f32 to vector<2x1x8x128xf32>
    %9 = arith.addf %7, %8 : vector<2x1x8x128xf32>
    %cst_9 = arith.constant 5.000000e-01 : f32
    %10 = vector.broadcast %cst_9 : f32 to vector<2x1x8x128xf32>
    %11 = arith.mulf %10, %9 : vector<2x1x8x128xf32>
    %c0_10 = arith.constant 0 : index
    %c0_11 = arith.constant 0 : index
    %c0_12 = arith.constant 0 : index
    %c0_13 = arith.constant 0 : index
    %12 = vector.load %arg4[%c0_10, %c0_11, %c0_12, %c0_13] : memref<1x2x8x128xf32, #tpu.memory_space<vmem>>, vector<1x2x8x128xf32>
    %13 = arith.mulf %11, %4 : vector<2x1x8x128xf32>
    %cst_14 = arith.constant dense<0.000000e+00> : vector<2x8x128xf32>
    %14 = vector.multi_reduction <add>, %13, %cst_14 [1] : vector<2x1x8x128xf32> to vector<2x8x128xf32>
    %15 = vector.shape_cast %14 : vector<2x8x128xf32> to vector<1x2x8x128xf32>
    %16 = arith.addf %12, %15 : vector<1x2x8x128xf32>
    %c0_15 = arith.constant 0 : index
    %c0_16 = arith.constant 0 : index
    %c0_17 = arith.constant 0 : index
    %c0_18 = arith.constant 0 : index
    %17 = vector.load %arg4[%c0_15, %c0_16, %c0_17, %c0_18] : memref<1x2x8x128xf32, #tpu.memory_space<vmem>>, vector<1x2x8x128xf32>
    tpu.vector_store %arg4[%c0_15, %c0_16, %c0_17, %c0_18], %16 {strides = array<i32>} : memref<1x2x8x128xf32, #tpu.memory_space<vmem>>, vector<1x2x8x128xf32>,
    %c0_19 = arith.constant 0 : index
    %c0_20 = arith.constant 0 : index
    %c0_21 = arith.constant 0 : index
    %c0_22 = arith.constant 0 : index
    %18 = vector.load %arg5[%c0_19, %c0_20, %c0_21, %c0_22] : memref<1x2x8x128xf32, #tpu.memory_space<vmem>>, vector<1x2x8x128xf32>
    %19 = arith.mulf %11, %11 : vector<2x1x8x128xf32>
    %cst_23 = arith.constant dense<0.000000e+00> : vector<2x8x128xf32>
    %20 = vector.multi_reduction <add>, %19, %cst_23 [1] : vector<2x1x8x128xf32> to vector<2x8x128xf32>
    %21 = vector.shape_cast %20 : vector<2x8x128xf32> to vector<1x2x8x128xf32>
    %22 = arith.addf %18, %21 : vector<1x2x8x128xf32>
    %c0_24 = arith.constant 0 : index
    %c0_25 = arith.constant 0 : index
    %c0_26 = arith.constant 0 : index
    %c0_27 = arith.constant 0 : index
    %23 = vector.load %arg5[%c0_24, %c0_25, %c0_26, %c0_27] : memref<1x2x8x128xf32, #tpu.memory_space<vmem>>, vector<1x2x8x128xf32>
    tpu.vector_store %arg5[%c0_24, %c0_25, %c0_26, %c0_27], %22 {strides = array<i32>} : memref<1x2x8x128xf32, #tpu.memory_space<vmem>>, vector<1x2x8x128xf32>,
    %c0_28 = arith.constant 0 : index
    %c0_29 = arith.constant 0 : index
    %c0_30 = arith.constant 0 : index
    %c0_31 = arith.constant 0 : index
    %24 = vector.load %arg6[%c0_28, %c0_29, %c0_30, %c0_31] : memref<1x2x8x128xf32, #tpu.memory_space<vmem>>, vector<1x2x8x128xf32>
    %25 = arith.mulf %4, %4 : vector<2x1x8x128xf32>
    %cst_32 = arith.constant dense<0.000000e+00> : vector<2x8x128xf32>
    %26 = vector.multi_reduction <add>, %25, %cst_32 [1] : vector<2x1x8x128xf32> to vector<2x8x128xf32>
    %27 = vector.shape_cast %26 : vector<2x8x128xf32> to vector<1x2x8x128xf32>
    %28 = arith.addf %24, %27 : vector<1x2x8x128xf32>
    %c0_33 = arith.constant 0 : index
    %c0_34 = arith.constant 0 : index
    %c0_35 = arith.constant 0 : index
    %c0_36 = arith.constant 0 : index
    %29 = vector.load %arg6[%c0_33, %c0_34, %c0_35, %c0_36] : memref<1x2x8x128xf32, #tpu.memory_space<vmem>>, vector<1x2x8x128xf32>
    tpu.vector_store %arg6[%c0_33, %c0_34, %c0_35, %c0_36], %28 {strides = array<i32>} : memref<1x2x8x128xf32, #tpu.memory_space<vmem>>, vector<1x2x8x128xf32>,
    return
  }
  func.func @transform_0(%arg0: i32, %arg1: i32) -> (i32, i32, i32, i32) {
    %c1_i32 = arith.constant 1 : i32
    %0 = arith.muli %arg0, %c1_i32 : i32
    %1 = arith.addi %0, %arg1 : i32
    %c0_i32 = arith.constant 0 : i32
    %c0_i32_0 = arith.constant 0 : i32
    %c0_i32_1 = arith.constant 0 : i32
    %c0_i32_2 = arith.constant 0 : i32
    return %c0_i32, %1, %c0_i32_0, %c0_i32_1 : i32, i32, i32, i32
  }
  func.func @transform_1(%arg0: i32, %arg1: i32) -> (i32, i32, i32, i32) {
    %c1_i32 = arith.constant 1 : i32
    %0 = arith.muli %arg0, %c1_i32 : i32
    %1 = arith.addi %0, %arg1 : i32
    %c0_i32 = arith.constant 0 : i32
    %c0_i32_0 = arith.constant 0 : i32
    %c0_i32_1 = arith.constant 0 : i32
    %c0_i32_2 = arith.constant 0 : i32
    return %c0_i32, %1, %c0_i32_0, %c0_i32_1 : i32, i32, i32, i32
  }
  func.func @transform_2(%arg0: i32, %arg1: i32) -> (i32, i32, i32, i32) {
    %c0_i32 = arith.constant 0 : i32
    %c0_i32_0 = arith.constant 0 : i32
    %c0_i32_1 = arith.constant 0 : i32
    %c0_i32_2 = arith.constant 0 : i32
    return %arg0, %c0_i32, %c0_i32_0, %c0_i32_1 : i32, i32, i32, i32
  }
  func.func @transform_3(%arg0: i32, %arg1: i32) -> (i32, i32, i32, i32) {
    %c0_i32 = arith.constant 0 : i32
    %c0_i32_0 = arith.constant 0 : i32
    %c0_i32_1 = arith.constant 0 : i32
    %c0_i32_2 = arith.constant 0 : i32
    return %arg0, %c0_i32, %c0_i32_0, %c0_i32_1 : i32, i32, i32, i32
  }
  func.func @transform_4(%arg0: i32, %arg1: i32) -> (i32, i32, i32, i32) {
    %c0_i32 = arith.constant 0 : i32
    %c0_i32_0 = arith.constant 0 : i32
    %c0_i32_1 = arith.constant 0 : i32
    %c0_i32_2 = arith.constant 0 : i32
    return %arg0, %c0_i32, %c0_i32_0, %c0_i32_1 : i32, i32, i32, i32
  }
}

</mosaic_0001>

<llo_original>
// kernel: soft_dice_loss_binary.1
$region0: #{soft_dice_loss_binary.1}
  #allocation0 [shape = 'u32[]', space=smem, size = 0x4, offset = 0x4, fixed_abs, tag = 'smem constant byte address 0x4 - core index']
  #allocation1 [shape = 'u32[144,128]{1,0:T(1,128)}', space=vmem, size = 0x12000, scoped, tag = 'internal scratch']
  %s0 = inlined_call_operand.vmem [shape: f32[2,1,8,128], index: 0, kind: input, shape index: {}]
  %s1 = inlined_call_operand.vmem [shape: f32[2,1,8,128], index: 1, kind: input, shape index: {}]
  %s2 = inlined_call_operand.vmem [shape: f32[1,2,8,128], index: 2, kind: output, shape index: {0}]
  %s3 = inlined_call_operand.vmem [shape: f32[1,2,8,128], index: 3, kind: output, shape index: {1}]
  %s4 = inlined_call_operand.vmem [shape: f32[1,2,8,128], index: 4, kind: output, shape index: {2}]
  %5 = xla_tuple %s2, %s3, %s4
  %s6 = sld [smem:[#allocation0]]
  $region38: #{soft_dice_loss_binary.1} parent=0
    _
  %s8 = ssub.s32 1, %s6
  %s9 = scalar_select 0, %s8, %s6
  // Predicated region
  $region2: #{soft_dice_loss_binary.1} parent=0 // pred_check
    _
  $region3: #{soft_dice_loss_binary.1} parent=0 // pred_check_branch
    %11 = sbr.rel (0) target = $region5
  $region4: #{soft_dice_loss_binary.1} parent=0 // pred_region
    %s12 = sadd.s32 0, 0
    %p13 = scmp.lt.s32.totalorder %s12, 0
    %s14 = scalar_select %p13, %s12, 0
    %s15 = smul.addr %s14, 8
    %s16 = scalar_lea.vmem %s0, %s15
    %s17 = sadd.s32 0, 0
  $region5: #{soft_dice_loss_binary.1} parent=0 // pred_fallthru
    _
  // Predicated region
  $region6: #{soft_dice_loss_binary.1} parent=0 // pred_check
    _
  $region7: #{soft_dice_loss_binary.1} parent=0 // pred_check_branch
    %19 = sbr.rel (0) target = $region9
  $region8: #{soft_dice_loss_binary.1} parent=0 // pred_region
    %s20 = sadd.s32 0, 0
    %p21 = scmp.lt.s32.totalorder %s20, 0
    %s22 = scalar_select %p21, %s20, 0
    %s23 = smul.addr %s22, 8
    %s24 = scalar_lea.vmem %s1, %s23
    %s25 = sadd.s32 0, 0
  $region9: #{soft_dice_loss_binary.1} parent=0 // pred_fallthru
    _
  %s26 = sadd.s32 0, 0
  %p27 = scmp.lt.s32.totalorder %s26, 0
  %s28 = scalar_select %p27, %s26, 0
  %s29 = smul.addr %s28, 8
  %s30 = scalar_lea.vmem %s0, %s29
  %s31 = sadd.s32 0, 0
  %p32 = scmp.lt.s32.totalorder %s31, 0
  %s33 = scalar_select %p32, %s31, 0
  %s34 = smul.addr %s33, 8
  %s35 = scalar_lea.vmem %s1, %s34
  %s36 = sadd.s32 0, 0
  %p37 = scmp.lt.s32.totalorder %s36, 0
  %s38 = scalar_select %p37, %s36, 0
  %s39 = smul.addr %s38, 8
  %s40 = scalar_lea.vmem %s0, %s39
  %s41 = sadd.s32 0, 0
  %s42 = sadd.s32 0, 0
  %p43 = scmp.lt.s32.totalorder %s42, 0
  %s44 = scalar_select %p43, %s42, 0
  %s45 = smul.addr %s44, 8
  %s46 = scalar_lea.vmem %s1, %s45
  %s47 = sadd.s32 0, 0
  %p48 = scmp.eq.s32.totalorder 0, 0
  // Predicated region
  $region10: #{soft_dice_loss_binary.1} parent=0 // pred_check
    %p49 = pneg %p48
  $region11: #{soft_dice_loss_binary.1} parent=0 // pred_check_branch
    %51 = sbr.rel (%p49) target = $region13
  $region12: #{soft_dice_loss_binary.1} parent=0 // pred_region
    %52 = vst [vmem:[%s2] sm:$0xff] 0.0
    %53 = vst [vmem:[%s2 + $0x8] sm:$0xff] 0.0
    %54 = vst [vmem:[%s3] sm:$0xff] 0.0
    %55 = vst [vmem:[%s3 + $0x8] sm:$0xff] 0.0
    %56 = vst [vmem:[%s4] sm:$0xff] 0.0
    %57 = vst [vmem:[%s4 + $0x8] sm:$0xff] 0.0
  $region13: #{soft_dice_loss_binary.1} parent=0 // pred_fallthru
    _
  %v58 = vld [vmem:[%s40] sm:$0xff]
  %v59 = vld [vmem:[%s40 + $0x8] sm:$0xff]
  %v60 = vld [vmem:[%s46] sm:$0xff]
  %v61 = vld [vmem:[%s46 + $0x8] sm:$0xff]
  %v62 = vmul.f32 %v58, 0.5
  %v63 = vmul.f32 %v59, 0.5
  %v64 = vtanh.pop %v62
  %v65 = vtanh.pop %v63
  %v66 = vadd.f32 %v64, 1.0
  %v67 = vadd.f32 %v65, 1.0
  %v68 = vmul.f32 %v66, 0.5
  %v69 = vmul.f32 %v67, 0.5
  %v70 = vld [vmem:[%s2] sm:$0xff]
  %v71 = vld [vmem:[%s2 + $0x8] sm:$0xff]
  %v72 = vmul.f32 %v68, %v60
  %v73 = vmul.f32 %v69, %v61
  %v74 = vadd.f32 %v72, 0.0
  %v75 = vadd.f32 %v73, 0.0
  %v76 = vadd.f32 %v70, %v74
  %v77 = vadd.f32 %v71, %v75
  %78 = vst [vmem:[%s2] sm:$0xff] %v76
  %79 = vst [vmem:[%s2 + $0x8] sm:$0xff] %v77
  %v80 = vld [vmem:[%s3] sm:$0xff]
  %v81 = vld [vmem:[%s3 + $0x8] sm:$0xff]
  %v82 = vmul.f32 %v68, %v68
  %v83 = vmul.f32 %v69, %v69
  %v84 = vadd.f32 %v82, 0.0
  %v85 = vadd.f32 %v83, 0.0
  %v86 = vadd.f32 %v80, %v84
  %v87 = vadd.f32 %v81, %v85
  %88 = vst [vmem:[%s3] sm:$0xff] %v86
  %89 = vst [vmem:[%s3 + $0x8] sm:$0xff] %v87
  %v90 = vld [vmem:[%s4] sm:$0xff]
  %v91 = vld [vmem:[%s4 + $0x8] sm:$0xff]
  %v92 = vmul.f32 %v60, %v60
  %v93 = vmul.f32 %v61, %v61
  %v94 = vadd.f32 %v92, 0.0
  %v95 = vadd.f32 %v93, 0.0
  %v96 = vadd.f32 %v90, %v94
  %v97 = vadd.f32 %v91, %v95
  %98 = vst [vmem:[%s4] sm:$0xff] %v96
  %99 = vst [vmem:[%s4 + $0x8] sm:$0xff] %v97
  // Predicated region
  $region14: #{soft_dice_loss_binary.1} parent=0 // pred_check
    _
  $region15: #{soft_dice_loss_binary.1} parent=0 // pred_check_branch
    %101 = sbr.rel (0) target = $region17
  $region16: #{soft_dice_loss_binary.1} parent=0 // pred_region
    _
  $region17: #{soft_dice_loss_binary.1} parent=0 // pred_fallthru
    _
  // Predicated region
  $region18: #{soft_dice_loss_binary.1} parent=0 // pred_check
    _
  $region19: #{soft_dice_loss_binary.1} parent=0 // pred_check_branch
    %103 = sbr.rel (0) target = $region21
  $region20: #{soft_dice_loss_binary.1} parent=0 // pred_region
    _
  $region21: #{soft_dice_loss_binary.1} parent=0 // pred_fallthru
    _
  // Predicated region
  $region22: #{soft_dice_loss_binary.1} parent=0 // pred_check
    _
  $region23: #{soft_dice_loss_binary.1} parent=0 // pred_check_branch
    %105 = sbr.rel (0) target = $region25
  $region24: #{soft_dice_loss_binary.1} parent=0 // pred_region
    _
  $region25: #{soft_dice_loss_binary.1} parent=0 // pred_fallthru
    _
  // Predicated region
  $region26: #{soft_dice_loss_binary.1} parent=0 // pred_check
    _
  $region27: #{soft_dice_loss_binary.1} parent=0 // pred_check_branch
    %107 = sbr.rel (0) target = $region29
  $region28: #{soft_dice_loss_binary.1} parent=0 // pred_region
    _
  $region29: #{soft_dice_loss_binary.1} parent=0 // pred_fallthru
    _
  // Predicated region
  $region30: #{soft_dice_loss_binary.1} parent=0 // pred_check
    _
  $region31: #{soft_dice_loss_binary.1} parent=0 // pred_check_branch
    %109 = sbr.rel (0) target = $region33
  $region32: #{soft_dice_loss_binary.1} parent=0 // pred_region
    _
  $region33: #{soft_dice_loss_binary.1} parent=0 // pred_fallthru
    _
  // Predicated region
  $region34: #{soft_dice_loss_binary.1} parent=0 // pred_check
    _
  $region35: #{soft_dice_loss_binary.1} parent=0 // pred_check_branch
    %111 = sbr.rel (0) target = $region37
  $region36: #{soft_dice_loss_binary.1} parent=0 // pred_region
    _
  $region37: #{soft_dice_loss_binary.1} parent=0 // pred_fallthru
    _

</llo_original>
